<compile_context>
chip_gen: v7x
topology: tpu7x:2x2x1
jax: 0.10.0
libtpu: 0.0.40
codegen_flags: <defaults>
</compile_context>

<pallas_src>
import functools

import jax
import jax.numpy as jnp
from jax.experimental import pallas as pl
from jax.experimental.pallas import tpu as pltpu


# ----------------------------------------------------------------------------
# GroupNorm statistics kernel: emits per-(sample, channel) affine (scale, shift)
# such that GroupNorm(x)*gamma + beta == x*scale + shift.  Grid is (N, D) with
# D as the ("arbitrary") reduction axis so only one depth slab is resident.
# ----------------------------------------------------------------------------
def _gn_stats_kernel(x_ref, g_ref, b_ref, m_ref, a_ref, s_ref, s1_sc, s2_sc,
                     *, eps, cnt):
    d = pl.program_id(1)

    @pl.when(d == 0)
    def _():
        s1_sc[...] = jnp.zeros_like(s1_sc)
        s2_sc[...] = jnp.zeros_like(s2_sc)

    x = x_ref[...].astype(jnp.float32)                          # (H, W, C)
    C = x.shape[-1]
    s1_sc[...] += jnp.sum(x, axis=(0, 1), keepdims=True).reshape(1, C)
    s2_sc[...] += jnp.sum(x * x, axis=(0, 1), keepdims=True).reshape(1, C)

    @pl.when(d == pl.num_programs(1) - 1)
    def _():
        inv = 1.0 / cnt
        # Group statistics via a tiny (1,C)x(C,C) group-membership matmul.
        mean = jnp.dot(s1_sc[...], m_ref[...],
                       preferred_element_type=jnp.float32) * inv
        ex2 = jnp.dot(s2_sc[...], m_ref[...],
                      preferred_element_type=jnp.float32) * inv
        # TODO(synk): E[x^2]-E[x]^2 can cancel for very large volumes; clamp to
        # >=0 here, a two-pass formulation would be more robust.
        var = jnp.maximum(ex2 - mean * mean, 0.0)
        a = g_ref[...].astype(jnp.float32) * jax.lax.rsqrt(var + eps)
        a_ref[...] = a
        s_ref[...] = b_ref[...].astype(jnp.float32) - mean * a


def gn_affine(x, gamma, beta, groups, eps=1e-6):
    N, D, H, W, C = x.shape
    cg = C // groups
    gid = jnp.arange(C) // cg
    mask = (gid[:, None] == gid[None, :]).astype(jnp.float32)   # (C, C)
    cnt = float(cg * D * H * W)
    kernel = functools.partial(_gn_stats_kernel, eps=float(eps), cnt=cnt)
    scale, shift = pl.pallas_call(
        kernel,
        out_shape=(jax.ShapeDtypeStruct((N, 1, C), jnp.float32),
                   jax.ShapeDtypeStruct((N, 1, C), jnp.float32)),
        grid=(N, D),
        in_specs=[
            pl.BlockSpec((None, None, H, W, C), lambda n, d: (n, d, 0, 0, 0)),
            pl.BlockSpec((1, C), lambda n, d: (0, 0)),
            pl.BlockSpec((1, C), lambda n, d: (0, 0)),
            pl.BlockSpec((C, C), lambda n, d: (0, 0)),
        ],
        out_specs=(pl.BlockSpec((None, 1, C), lambda n, d: (n, 0, 0)),
                   pl.BlockSpec((None, 1, C), lambda n, d: (n, 0, 0))),
        scratch_shapes=[pltpu.VMEM((1, C), jnp.float32),
                        pltpu.VMEM((1, C), jnp.float32)],
        compiler_params=pltpu.CompilerParams(
            dimension_semantics=("parallel", "arbitrary")),
    )(x, gamma.reshape(1, C), beta.reshape(1, C), mask)
    return scale, shift


# ----------------------------------------------------------------------------
# Fused Conv3d kernel.  One grid step = one output depth plane (Ho, Wo, Cout)
# of one sample.  Optional fused GN-affine+SiLU on the input, optional fused
# residual (identity skip or 1x1x1 shortcut conv).
# ----------------------------------------------------------------------------
def _fused_conv3d_kernel(*refs, K, stride, D, H, W, Ho, Wo, Cout, pad, cpad,
                         fuse_gn, res_mode):
    idx = 0
    x_refs = refs[idx:idx + K]; idx += K            # K depth taps, each (H, W, Cin)
    w_ref = refs[idx]; idx += 1                     # (K, K, K, Cin, Cout)
    b_ref = refs[idx]; idx += 1                     # (1, Cout)
    if fuse_gn:
        a_ref = refs[idx]; idx += 1                 # (1, Cin) GN scale
        s_ref = refs[idx]; idx += 1                 # (1, Cin) GN shift
    if res_mode is not None:
        r_ref = refs[idx]; idx += 1                 # (H, W, Cr) residual slab
        if res_mode == "conv":
            wsc_ref = refs[idx]; idx += 1           # (Cr, Cout)
            bsc_ref = refs[idx]; idx += 1           # (1, Cout)
    o_ref = refs[idx]; idx += 1                     # (Ho, Wo, Cout)
    xpad_ref = refs[idx]; idx += 1                  # scratch (H+2p, W+2cpad, Cin)

    od = pl.program_id(1)
    c0 = cpad - pad                                 # column start of tap kw=0

    # Zero the padded slab; only the interior is rewritten per depth tap, the
    # halo border stays zero (this provides the H/W "same" padding).
    xpad_ref[...] = jnp.zeros_like(xpad_ref)

    acc = jnp.zeros((Ho * Wo, Cout), jnp.float32)
    for kd in range(K):
        slab = x_refs[kd][...].astype(jnp.float32)          # (H, W, Cin)
        if fuse_gn:
            a = a_ref[...].astype(jnp.float32).reshape(1, 1, -1)
            s = s_ref[...].astype(jnp.float32).reshape(1, 1, -1)
            y = slab * a + s
            slab = y * jax.nn.sigmoid(y)                    # GroupNorm + SiLU
        # Zero the whole tap when it falls into the depth padding halo.
        dd = od * stride + kd - pad
        dvalid = jnp.logical_and(dd >= 0, dd <= D - 1)
        slab = slab * dvalid.astype(jnp.float32)
        # Interior store is sublane-aligned (cpad is a multiple of 8).
        xpad_ref[pad:pad + H, cpad:cpad + W, :] = slab
        for kh in range(K):
            for kw in range(K):
                if stride == 1:
                    tap = xpad_ref[kh:kh + Ho, c0 + kw:c0 + kw + Wo, :]
                else:
                    tap = xpad_ref[pl.ds(kh, Ho, stride),
                                   pl.ds(c0 + kw, Wo, stride), :]
                acc = acc + jnp.dot(tap.reshape(Ho * Wo, -1),
                                    w_ref[kd, kh, kw],
                                    preferred_element_type=jnp.float32)

    out = acc + b_ref[...].astype(jnp.float32)
    if res_mode == "conv":
        r = r_ref[...].astype(jnp.float32).reshape(Ho * Wo, -1)
        out = out + jnp.dot(r, wsc_ref[...], preferred_element_type=jnp.float32)
        out = out + bsc_ref[...].astype(jnp.float32)
    elif res_mode == "identity":
        out = out + r_ref[...].astype(jnp.float32).reshape(Ho * Wo, -1)

    o_ref[...] = out.reshape(Ho, Wo, Cout).astype(o_ref.dtype)


def conv3d_fused(x, w, b, *, stride=1, gn=None, residual=None,
                 residual_w=None, residual_b=None):
    """Conv3d with 'same'-style zero padding (PyTorch padding=(K-1)//2).

    gn        : optional (scale, shift) of shape (N,1,Cin) -> fused affine+SiLU
                applied to the input before the convolution.
    residual  : optional (N, Do, Ho, Wo, Cr) tensor added to the output.  If
                residual_w is given, a fused 1x1x1 conv (Cr->Cout) is applied
                to it first (the ResNet shortcut); otherwise identity skip.
    """
    N, D, H, W, Cin = x.shape
    K = w.shape[0]
    Cout = w.shape[-1]
    pad = (K - 1) // 2
    Do = (D + 2 * pad - K) // stride + 1
    Ho = (H + 2 * pad - K) // stride + 1
    Wo = (W + 2 * pad - K) // stride + 1
    cpad = 8 if pad > 0 else 0          # sublane-aligned left/right W halo

    fuse_gn = gn is not None
    if residual is not None and residual_w is not None:
        res_mode = "conv"
    elif residual is not None:
        res_mode = "identity"
    else:
        res_mode = None

    args = []
    in_specs = []
    # K depth-tap views of the (unpadded) input; the index map clamps the
    # depth index, the kernel zeroes out-of-range taps.
    for kd in range(K):
        def imap(n, od, kd=kd):
            dd = jnp.clip(od * stride + kd - pad, 0, D - 1)
            return (n, dd, 0, 0, 0)
        in_specs.append(pl.BlockSpec((None, None, H, W, Cin), imap))
        args.append(x)
    in_specs.append(pl.BlockSpec((K, K, K, Cin, Cout),
                                 lambda n, od: (0, 0, 0, 0, 0)))
    args.append(w)
    in_specs.append(pl.BlockSpec((1, Cout), lambda n, od: (0, 0)))
    args.append(b.reshape(1, Cout))
    if fuse_gn:
        a, s = gn
        in_specs.append(pl.BlockSpec((None, 1, Cin), lambda n, od: (n, 0, 0)))
        args.append(a)
        in_specs.append(pl.BlockSpec((None, 1, Cin), lambda n, od: (n, 0, 0)))
        args.append(s)
    if res_mode is not None:
        Cr = residual.shape[-1]
        in_specs.append(pl.BlockSpec((None, None, H, W, Cr),
                                     lambda n, od: (n, od, 0, 0, 0)))
        args.append(residual)
        if res_mode == "conv":
            in_specs.append(pl.BlockSpec((Cr, Cout), lambda n, od: (0, 0)))
            args.append(residual_w.reshape(Cr, Cout))
            in_specs.append(pl.BlockSpec((1, Cout), lambda n, od: (0, 0)))
            args.append(residual_b.reshape(1, Cout))

    kernel = functools.partial(
        _fused_conv3d_kernel, K=K, stride=stride, D=D, H=H, W=W,
        Ho=Ho, Wo=Wo, Cout=Cout, pad=pad, cpad=cpad,
        fuse_gn=fuse_gn, res_mode=res_mode)

    return pl.pallas_call(
        kernel,
        out_shape=jax.ShapeDtypeStruct((N, Do, Ho, Wo, Cout), x.dtype),
        grid=(N, Do),
        in_specs=in_specs,
        out_specs=pl.BlockSpec((None, None, Ho, Wo, Cout),
                               lambda n, od: (n, od, 0, 0, 0)),
        scratch_shapes=[pltpu.VMEM((H + 2 * pad, W + 2 * cpad, Cin),
                                   jnp.float32)],
        compiler_params=pltpu.CompilerParams(
            dimension_semantics=("parallel", "parallel")),
    )(*args)


# ----------------------------------------------------------------------------
# Module assembly (Pallas-backed)
# ----------------------------------------------------------------------------
def resnet_block(x, p, groups, eps=1e-6):
    cin = x.shape[-1]
    cout = p["conv1_w"].shape[-1]
    a1, s1 = gn_affine(x, p["gn1_g"], p["gn1_b"], groups, eps)
    h = conv3d_fused(x, p["conv1_w"], p["conv1_b"], gn=(a1, s1))
    a2, s2 = gn_affine(h, p["gn2_g"], p["gn2_b"], groups, eps)
    # dropout(p=0.0) == identity
    if "sc_w" in p:
        return conv3d_fused(h, p["conv2_w"], p["conv2_b"], gn=(a2, s2),
                            residual=x,
                            residual_w=p["sc_w"].reshape(cin, cout),
                            residual_b=p["sc_b"])
    return conv3d_fused(h, p["conv2_w"], p["conv2_b"], gn=(a2, s2), residual=x)


def down_block_volume(x, params):
    output_states = ()
    h = x
    for rp in params["resnets"]:
        h = resnet_block(h, rp, params["groups"], params["eps"])
        output_states += (h,)
    if params.get("down") is not None:
        h = conv3d_fused(h, params["down"]["w"], params["down"]["b"], stride=2)
        output_states += (h,)
    return h, output_states


# ----------------------------------------------------------------------------
# Pure-JAX reference (for correctness checking)
# ----------------------------------------------------------------------------
def _ref_conv3d(x, w, b, stride=1):
    K = w.shape[0]
    pad = (K - 1) // 2
    out = jax.lax.conv_general_dilated(
        x, w, window_strides=(stride,) * 3, padding=[(pad, pad)] * 3,
        dimension_numbers=("NDHWC", "DHWIO", "NDHWC"))
    return out + b.reshape(1, 1, 1, 1, -1)


def _ref_gn_swish(x, g, b, groups, eps):
    N, D, H, W, C = x.shape
    xg = x.reshape(N, D, H, W, groups, C // groups)
    mean = jnp.mean(xg, axis=(1, 2, 3, 5), keepdims=True)
    var = jnp.mean((xg - mean) ** 2, axis=(1, 2, 3, 5), keepdims=True)
    xn = ((xg - mean) * jax.lax.rsqrt(var + eps)).reshape(x.shape)
    y = xn * g.reshape(1, 1, 1, 1, C) + b.reshape(1, 1, 1, 1, C)
    return y * jax.nn.sigmoid(y)


def _ref_resnet(x, p, groups, eps):
    h = _ref_gn_swish(x, p["gn1_g"], p["gn1_b"], groups, eps)
    h = _ref_conv3d(h, p["conv1_w"], p["conv1_b"], 1)
    h = _ref_gn_swish(h, p["gn2_g"], p["gn2_b"], groups, eps)
    h = _ref_conv3d(h, p["conv2_w"], p["conv2_b"], 1)
    sc = _ref_conv3d(x, p["sc_w"], p["sc_b"], 1) if "sc_w" in p else x
    return sc + h


def _ref_down_block(x, params):
    output_states = ()
    h = x
    for rp in params["resnets"]:
        h = _ref_resnet(h, rp, params["groups"], params["eps"])
        output_states += (h,)
    if params.get("down") is not None:
        h = _ref_conv3d(h, params["down"]["w"], params["down"]["b"], 2)
        output_states += (h,)
    return h, output_states


# ----------------------------------------------------------------------------
# Deterministic parameter init (shapes follow the PyTorch module __init__)
# ----------------------------------------------------------------------------
def init_params(key, cin, cout, num_layers, groups, eps=1e-6):
    keys = iter(jax.random.split(key, 128))

    def rnd(shape, scale=0.05):
        return jax.random.normal(next(keys), shape, jnp.float32) * scale

    resnets = []
    ic = cin
    for _ in range(num_layers):
        p = {
            "gn1_g": 1.0 + rnd((ic,), 0.1),
            "gn1_b": rnd((ic,), 0.1),
            "conv1_w": rnd((3, 3, 3, ic, cout)),
            "conv1_b": rnd((cout,), 0.1),
            "gn2_g": 1.0 + rnd((cout,), 0.1),
            "gn2_b": rnd((cout,), 0.1),
            "conv2_w": rnd((3, 3, 3, cout, cout)),
            "conv2_b": rnd((cout,), 0.1),
        }
        if ic != cout:  # use_in_shortcut
            p["sc_w"] = rnd((1, 1, 1, ic, cout))
            p["sc_b"] = rnd((cout,), 0.1)
        resnets.append(p)
        ic = cout
    down = {"w": rnd((3, 3, 3, cout, cout)), "b": rnd((cout,), 0.1)}
    return {"resnets": resnets, "down": down, "groups": groups, "eps": eps}


if __name__ == "__main__":
    # batch=2, in_channels=4, out_channels=8, spatial 16^3 (W a multiple of 8
    # keeps all in-kernel reshapes tile-aligned), resnet_groups=2,
    # num_layers=2, add_downsample=True.
    key = jax.random.PRNGKey(0)
    k_x, k_p = jax.random.split(key)
    N, Cin, Cout, S = 2, 4, 8, 16
    x = jax.random.normal(k_x, (N, S, S, S, Cin), jnp.float32)  # NDHWC
    params = init_params(k_p, Cin, Cout, num_layers=2, groups=2, eps=1e-6)

    h_pl, states_pl = down_block_volume(x, params)
    h_pl = jax.block_until_ready(h_pl)

    h_ref, states_ref = _ref_down_block(x, params)

    assert h_pl.shape == (N, S // 2, S // 2, S // 2, Cout)
    assert len(states_pl) == len(states_ref) == 3
    ok = True
    for a, r in zip((h_pl,) + states_pl, (h_ref,) + states_ref):
        diff = float(jnp.max(jnp.abs(a - r)))
        if diff > 1e-3:
            ok = False
            print("max abs diff:", diff)
    if ok:
        print("KERNEL_OK")
</pallas_src>

<mosaic_0001>
module attributes {stable_mosaic.version = 11 : i64} {
  func.func @_gn_stats_kernel(%arg0: i32, %arg1: i32, %arg2: memref<1x1x16x16x4xf32, #tpu.memory_space<vmem>>, %arg3: memref<1x4xf32, #tpu.memory_space<vmem>>, %arg4: memref<1x4xf32, #tpu.memory_space<vmem>>, %arg5: memref<4x4xf32, #tpu.memory_space<vmem>>, %arg6: memref<1x1x4xf32, #tpu.memory_space<vmem>>, %arg7: memref<1x1x4xf32, #tpu.memory_space<vmem>>, %arg8: memref<1x4xf32, #tpu.memory_space<vmem>>, %arg9: memref<1x4xf32, #tpu.memory_space<vmem>>) attributes {dimension_semantics = [#tpu.dimension_semantics<parallel>, #tpu.dimension_semantics<arbitrary>], iteration_bounds = array<i64: 2, 16>, scalar_prefetch = 0 : i64, scratch_operands = 2 : i64, tpu.core_type = #tpu.core_type<tc>, window_params = [{transform_indices = @transform_0, window_bounds = array<i64: 1, 1, 16, 16, 4>}, {pipeline_mode = #tpu.pipeline_mode<synchronous>, transform_indices = @transform_1, window_bounds = array<i64: 1, 4>}, {pipeline_mode = #tpu.pipeline_mode<synchronous>, transform_indices = @transform_2, window_bounds = array<i64: 1, 4>}, {pipeline_mode = #tpu.pipeline_mode<synchronous>, transform_indices = @transform_3, window_bounds = array<i64: 4, 4>}, {transform_indices = @transform_4, window_bounds = array<i64: 1, 1, 4>}, {transform_indices = @transform_5, window_bounds = array<i64: 1, 1, 4>}]} {
    %c0_i32 = arith.constant 0 : i32
    %0 = arith.cmpi eq, %arg1, %c0_i32 : i32
    %1 = arith.extui %0 : i1 to i32
    %c0_i32_0 = arith.constant 0 : i32
    %2 = arith.cmpi ne, %1, %c0_i32_0 : i32
    scf.if %2 {
      %cst_15 = arith.constant 0.000000e+00 : f32
      %21 = vector.broadcast %cst_15 : f32 to vector<1x4xf32>
      %c0_16 = arith.constant 0 : index
      %c0_17 = arith.constant 0 : index
      %22 = vector.load %arg8[%c0_16, %c0_17] : memref<1x4xf32, #tpu.memory_space<vmem>>, vector<1x4xf32>
      tpu.vector_store %arg8[%c0_16, %c0_17], %21 {strides = array<i32>} : memref<1x4xf32, #tpu.memory_space<vmem>>, vector<1x4xf32>,
      %cst_18 = arith.constant 0.000000e+00 : f32
      %23 = vector.broadcast %cst_18 : f32 to vector<1x4xf32>
      %c0_19 = arith.constant 0 : index
      %c0_20 = arith.constant 0 : index
      %24 = vector.load %arg9[%c0_19, %c0_20] : memref<1x4xf32, #tpu.memory_space<vmem>>, vector<1x4xf32>
      tpu.vector_store %arg9[%c0_19, %c0_20], %23 {strides = array<i32>} : memref<1x4xf32, #tpu.memory_space<vmem>>, vector<1x4xf32>,
    } else {
    }
    %c0 = arith.constant 0 : index
    %c0_1 = arith.constant 0 : index
    %c0_2 = arith.constant 0 : index
    %c0_3 = arith.constant 0 : index
    %c0_4 = arith.constant 0 : index
    %3 = vector.load %arg2[%c0, %c0_1, %c0_2, %c0_3, %c0_4] : memref<1x1x16x16x4xf32, #tpu.memory_space<vmem>>, vector<1x1x16x16x4xf32>
    %4 = vector.shape_cast %3 : vector<1x1x16x16x4xf32> to vector<16x16x4xf32>
    %c0_5 = arith.constant 0 : index
    %c0_6 = arith.constant 0 : index
    %5 = vector.load %arg8[%c0_5, %c0_6] : memref<1x4xf32, #tpu.memory_space<vmem>>, vector<1x4xf32>
    %cst = arith.constant dense<0.000000e+00> : vector<4xf32>
    %6 = vector.multi_reduction <add>, %4, %cst [0, 1] : vector<16x16x4xf32> to vector<4xf32>
    %7 = vector.shape_cast %6 : vector<4xf32> to vector<1x1x4xf32>
    %8 = vector.shape_cast %7 : vector<1x1x4xf32> to vector<1x4xf32>
    %9 = arith.addf %5, %8 : vector<1x4xf32>
    %c0_7 = arith.constant 0 : index
    %c0_8 = arith.constant 0 : index
    %10 = vector.load %arg8[%c0_7, %c0_8] : memref<1x4xf32, #tpu.memory_space<vmem>>, vector<1x4xf32>
    tpu.vector_store %arg8[%c0_7, %c0_8], %9 {strides = array<i32>} : memref<1x4xf32, #tpu.memory_space<vmem>>, vector<1x4xf32>,
    %c0_9 = arith.constant 0 : index
    %c0_10 = arith.constant 0 : index
    %11 = vector.load %arg9[%c0_9, %c0_10] : memref<1x4xf32, #tpu.memory_space<vmem>>, vector<1x4xf32>
    %12 = arith.mulf %4, %4 : vector<16x16x4xf32>
    %cst_11 = arith.constant dense<0.000000e+00> : vector<4xf32>
    %13 = vector.multi_reduction <add>, %12, %cst_11 [0, 1] : vector<16x16x4xf32> to vector<4xf32>
    %14 = vector.shape_cast %13 : vector<4xf32> to vector<1x1x4xf32>
    %15 = vector.shape_cast %14 : vector<1x1x4xf32> to vector<1x4xf32>
    %16 = arith.addf %11, %15 : vector<1x4xf32>
    %c0_12 = arith.constant 0 : index
    %c0_13 = arith.constant 0 : index
    %17 = vector.load %arg9[%c0_12, %c0_13] : memref<1x4xf32, #tpu.memory_space<vmem>>, vector<1x4xf32>
    tpu.vector_store %arg9[%c0_12, %c0_13], %16 {strides = array<i32>} : memref<1x4xf32, #tpu.memory_space<vmem>>, vector<1x4xf32>,
    %c15_i32 = arith.constant 15 : i32
    %18 = arith.cmpi eq, %arg1, %c15_i32 : i32
    %19 = arith.extui %18 : i1 to i32
    %c0_i32_14 = arith.constant 0 : i32
    %20 = arith.cmpi ne, %19, %c0_i32_14 : i32
    scf.if %20 {
      %c0_15 = arith.constant 0 : index
      %c0_16 = arith.constant 0 : index
      %21 = vector.load %arg8[%c0_15, %c0_16] : memref<1x4xf32, #tpu.memory_space<vmem>>, vector<1x4xf32>
      %c0_17 = arith.constant 0 : index
      %c0_18 = arith.constant 0 : index
      %22 = vector.load %arg5[%c0_17, %c0_18] : memref<4x4xf32, #tpu.memory_space<vmem>>, vector<4x4xf32>
      %cst_19 = arith.constant dense<0.000000e+00> : vector<1x4xf32>
      %23 = tpu.matmul %21, %22, %cst_19 {dimension_numbers = #tpu.dot_dimension_numbers<[1], [0], [0], [1], [0, 0, 1, 1], [], []>} : vector<1x4xf32>, vector<4x4xf32>, vector<1x4xf32> -> vector<1x4xf32>
      %cst_20 = arith.constant 1.22070313E-4 : f32
      %24 = vector.broadcast %cst_20 : f32 to vector<1x4xf32>
      %25 = arith.mulf %23, %24 : vector<1x4xf32>
      %c0_21 = arith.constant 0 : index
      %c0_22 = arith.constant 0 : index
      %26 = vector.load %arg9[%c0_21, %c0_22] : memref<1x4xf32, #tpu.memory_space<vmem>>, vector<1x4xf32>
      %c0_23 = arith.constant 0 : index
      %c0_24 = arith.constant 0 : index
      %27 = vector.load %arg5[%c0_23, %c0_24] : memref<4x4xf32, #tpu.memory_space<vmem>>, vector<4x4xf32>
      %cst_25 = arith.constant dense<0.000000e+00> : vector<1x4xf32>
      %28 = tpu.matmul %26, %27, %cst_25 {dimension_numbers = #tpu.dot_dimension_numbers<[1], [0], [0], [1], [0, 0, 1, 1], [], []>} : vector<1x4xf32>, vector<4x4xf32>, vector<1x4xf32> -> vector<1x4xf32>
      %cst_26 = arith.constant 1.22070313E-4 : f32
      %29 = vector.broadcast %cst_26 : f32 to vector<1x4xf32>
      %30 = arith.mulf %28, %29 : vector<1x4xf32>
      %31 = arith.mulf %25, %25 : vector<1x4xf32>
      %32 = arith.subf %30, %31 : vector<1x4xf32>
      %cst_27 = arith.constant 0.000000e+00 : f32
      %33 = vector.broadcast %cst_27 : f32 to vector<1x4xf32>
      %34 = arith.maximumf %32, %33 : vector<1x4xf32>
      %c0_28 = arith.constant 0 : index
      %c0_29 = arith.constant 0 : index
      %35 = vector.load %arg3[%c0_28, %c0_29] : memref<1x4xf32, #tpu.memory_space<vmem>>, vector<1x4xf32>
      %cst_30 = arith.constant 9.99999997E-7 : f32
      %36 = vector.broadcast %cst_30 : f32 to vector<1x4xf32>
      %37 = arith.addf %34, %36 : vector<1x4xf32>
      %38 = math.rsqrt %37 : vector<1x4xf32>
      %39 = arith.mulf %35, %38 : vector<1x4xf32>
      %c0_31 = arith.constant 0 : index
      %c0_32 = arith.constant 0 : index
      %c0_33 = arith.constant 0 : index
      %40 = vector.load %arg6[%c0_31, %c0_32, %c0_33] : memref<1x1x4xf32, #tpu.memory_space<vmem>>, vector<1x1x4xf32>
      %41 = vector.shape_cast %40 : vector<1x1x4xf32> to vector<1x4xf32>
      %42 = vector.shape_cast %39 : vector<1x4xf32> to vector<1x1x4xf32>
      tpu.vector_store %arg6[%c0_31, %c0_32, %c0_33], %42 {strides = array<i32>} : memref<1x1x4xf32, #tpu.memory_space<vmem>>, vector<1x1x4xf32>,
      %c0_34 = arith.constant 0 : index
      %c0_35 = arith.constant 0 : index
      %43 = vector.load %arg4[%c0_34, %c0_35] : memref<1x4xf32, #tpu.memory_space<vmem>>, vector<1x4xf32>
      %44 = arith.mulf %25, %39 : vector<1x4xf32>
      %45 = arith.subf %43, %44 : vector<1x4xf32>
      %c0_36 = arith.constant 0 : index
      %c0_37 = arith.constant 0 : index
      %c0_38 = arith.constant 0 : index
      %46 = vector.load %arg7[%c0_36, %c0_37, %c0_38] : memref<1x1x4xf32, #tpu.memory_space<vmem>>, vector<1x1x4xf32>
      %47 = vector.shape_cast %46 : vector<1x1x4xf32> to vector<1x4xf32>
      %48 = vector.shape_cast %45 : vector<1x4xf32> to vector<1x1x4xf32>
      tpu.vector_store %arg7[%c0_36, %c0_37, %c0_38], %48 {strides = array<i32>} : memref<1x1x4xf32, #tpu.memory_space<vmem>>, vector<1x1x4xf32>,
    } else {
    }
    return
  }
  func.func @transform_0(%arg0: i32, %arg1: i32) -> (i32, i32, i32, i32, i32) {
    %c0_i32 = arith.constant 0 : i32
    %c0_i32_0 = arith.constant 0 : i32
    %c0_i32_1 = arith.constant 0 : i32
    %c0_i32_2 = arith.constant 0 : i32
    return %arg0, %arg1, %c0_i32, %c0_i32_0, %c0_i32_1 : i32, i32, i32, i32, i32
  }
  func.func @transform_1(%arg0: i32, %arg1: i32) -> (i32, i32) {
    %c0_i32 = arith.constant 0 : i32
    %c0_i32_0 = arith.constant 0 : i32
    %c0_i32_1 = arith.constant 0 : i32
    return %c0_i32, %c0_i32_0 : i32, i32
  }
  func.func @transform_2(%arg0: i32, %arg1: i32) -> (i32, i32) {
    %c0_i32 = arith.constant 0 : i32
    %c0_i32_0 = arith.constant 0 : i32
    %c0_i32_1 = arith.constant 0 : i32
    return %c0_i32, %c0_i32_0 : i32, i32
  }
  func.func @transform_3(%arg0: i32, %arg1: i32) -> (i32, i32) {
    %c0_i32 = arith.constant 0 : i32
    %c0_i32_0 = arith.constant 0 : i32
    %c0_i32_1 = arith.constant 0 : i32
    return %c0_i32, %c0_i32_0 : i32, i32
  }
  func.func @transform_4(%arg0: i32, %arg1: i32) -> (i32, i32, i32) {
    %c0_i32 = arith.constant 0 : i32
    %c0_i32_0 = arith.constant 0 : i32
    %c0_i32_1 = arith.constant 0 : i32
    return %arg0, %c0_i32, %c0_i32_0 : i32, i32, i32
  }
  func.func @transform_5(%arg0: i32, %arg1: i32) -> (i32, i32, i32) {
    %c0_i32 = arith.constant 0 : i32
    %c0_i32_0 = arith.constant 0 : i32
    %c0_i32_1 = arith.constant 0 : i32
    return %arg0, %c0_i32, %c0_i32_0 : i32, i32, i32
  }
}

</mosaic_0001>

<llo_original>
// kernel: tpu_custom_call.1
$region0: #{tpu_custom_call.1}
  #allocation0 [shape = 'u32[]', space=smem, size = 0x4, offset = 0x4, fixed_abs, tag = 'smem constant byte address 0x4 - core index']
  #allocation1 [shape = 'u32[144,128]{1,0:T(1,128)}', space=vmem, size = 0x12000, scoped, tag = 'internal scratch']
  #allocation2 [shape = 'f32[1,4]{1,0:T(1,128)}', space=vmem, size = 0x200, scoped, tag = 'scratch operand']
  #allocation3 [shape = 'f32[1,4]{1,0:T(1,128)}', space=vmem, size = 0x200, scoped, tag = 'scratch operand']
  %s0 = inlined_call_operand.vmem [shape: f32[2,16,16,16,4], index: 0, kind: input, shape index: {}]
  %s1 = inlined_call_operand.vmem [shape: f32[1,4], index: 1, kind: input, shape index: {}]
  %s2 = inlined_call_operand.vmem [shape: f32[1,4], index: 2, kind: input, shape index: {}]
  %s3 = inlined_call_operand.vmem [shape: f32[4,4], index: 3, kind: input, shape index: {}]
  %s4 = inlined_call_operand.hbm [shape: f32[2,1,4], index: 4, kind: output, shape index: {0}]
  %s5 = inlined_call_operand.hbm [shape: f32[2,1,4], index: 5, kind: output, shape index: {1}]
  %6 = xla_tuple %s4, %s5
  %s7 = sld [smem:[#allocation0]]
  $region65: #{tpu_custom_call.1} parent=0
    _
  %s9 = ssub.s32 1, %s7
  %s10 = scalar_select 0, %s9, %s7
  $region1: #{tpu_custom_call.1} parent=0
    #allocation4 [shape = 'u8[1024]{0}', space=vmem, size = 0x400, scoped, tag = 'output window, operand 0']
    #allocation5 [shape = 's32[2]{0}', space=sflag, size = 0x8, scoped, tag = 'scoped memory for tpu_custom_call.1']
    #allocation6 [shape = 'u8[1024]{0}', space=vmem, size = 0x400, scoped, tag = 'output window, operand 1']
    #allocation7 [shape = 's32[2]{0}', space=sflag, size = 0x8, scoped, tag = 'scoped memory for tpu_custom_call.1']
    %11 = vsyncpa [#allocation5], 0
    %s12 = scalar_lea.sflag [#allocation5], 1
    %13 = vsyncpa %s12, 0
    %14 = vsyncpa [#allocation7], 0
    %s15 = scalar_lea.sflag [#allocation7], 1
    %16 = vsyncpa %s15, 0
    loop: start=0, step=1, limit=34
    $region2: #{tpu_custom_call.1} parent=1 // loop_pre_header
      _
    $region3: #{tpu_custom_call.1} parent=1 // loop_header
      %s18 = sphi 0, %s22
      %p19 = scmp.ge.s32.totalorder %s18, 34
      %s25 = sphi 0, %s37
      %s26 = sphi 0, %s33
      %s27 = sphi 0, %s25
      %s28 = sphi 0, %s26
      %s29 = sphi 0, %s27
      %s30 = sphi 0, %s28
      %s42 = sphi 0, %s44
      %s45 = sphi 0, %s42
      %s46 = sphi 0, %s45
      %s62 = sphi 0, %s46
      %s66 = sphi 0, %s66
      %s68 = sphi 0, %s66
      %s69 = sphi 0, %s68
      %s83 = sphi 0, %s69
      %s87 = sphi 0, %s87
      %s89 = sphi 0, %s87
      %s90 = sphi 0, %s89
      %s104 = sphi 0, %s90
      %s108 = sphi 0, %s108
      %s110 = sphi 0, %s108
      %s111 = sphi 0, %s110
      %s125 = sphi 0, %s111
      %s131 = sphi 0, %s133
      %s134 = sphi 0, %s131
      %s135 = sphi 0, %s134
      %s151 = sphi 0, %s135
      %s157 = sphi 0, %s159
      %s160 = sphi 0, %s157
      %s161 = sphi 0, %s160
      %s177 = sphi 0, %s161
    $region4: #{tpu_custom_call.1} parent=1 // loop_header_branch
      %21 = sbr.rel (%p19) target = $region8
    $region5: #{tpu_custom_call.1} parent=1 // loop_body
      %s23 = ssub.s32 %s18, 1
      %s24 = ssub.s32 %s18, 2
      %s31 = sadd.s32 1, %s26
      %p32 = scmp.ge.s32.totalorder %s31, 16
      %s33 = scalar_select %p32, 0, %s31
      %s34 = sadd.s32 1, %s25
      %s35 = scalar_select %p32, %s34, %s25
      %p36 = scmp.ge.s32.totalorder %s35, 2
      %s37 = scalar_select %p36, 0, %s35
      %s38 = ssub.s32 %s25, %s37
      %s39 = ssub.s32 %s26, %s33
      %s40 = sor.u32 %s38, %s39
      %p41 = scmp.eq.s32.totalorder %s40, 0
      %s43 = sadd.s32 %s42, 1
      %s44 = scalar_select %p41, %s42, %s43
      %p47 = pneg %p41
      %p48 = scmp.eq.s32.totalorder %s18, 31
      %p49 = por %p47, %p48
      %p50 = scmp.ne.s32.totalorder %s42, %s45
      %p51 = scmp.eq.s32.totalorder %s18, 0
      %p52 = por %p50, %p51
      %p53 = scmp.ne.s32.totalorder %s42, %s45
      %p54 = scmp.eq.s32.totalorder %s23, 31
      %p55 = por %p53, %p54
      %p56 = scmp.ne.s32.totalorder %s45, %s46
      %p57 = scmp.eq.s32.totalorder %s23, 0
      %p58 = por %p56, %p57
      %p59 = scmp.ne.s32.totalorder %s45, %s46
      %p60 = scmp.eq.s32.totalorder %s24, 31
      %p61 = por %p59, %p60
      %p63 = scmp.ne.s32.totalorder %s46, %s62
      %p64 = scmp.eq.s32.totalorder %s24, 0
      %p65 = por %p63, %p64
      %s67 = sadd.s32 %s66, 1
      %p70 = scmp.eq.s32.totalorder %s18, 31
      %p71 = scmp.ne.s32.totalorder %s66, %s68
      %p72 = scmp.eq.s32.totalorder %s18, 0
      %p73 = por %p71, %p72
      %p74 = scmp.ne.s32.totalorder %s66, %s68
      %p75 = scmp.eq.s32.totalorder %s23, 31
      %p76 = por %p74, %p75
      %p77 = scmp.ne.s32.totalorder %s68, %s69
      %p78 = scmp.eq.s32.totalorder %s23, 0
      %p79 = por %p77, %p78
      %p80 = scmp.ne.s32.totalorder %s68, %s69
      %p81 = scmp.eq.s32.totalorder %s24, 31
      %p82 = por %p80, %p81
      %p84 = scmp.ne.s32.totalorder %s69, %s83
      %p85 = scmp.eq.s32.totalorder %s24, 0
      %p86 = por %p84, %p85
      %s88 = sadd.s32 %s87, 1
      %p91 = scmp.eq.s32.totalorder %s18, 31
      %p92 = scmp.ne.s32.totalorder %s87, %s89
      %p93 = scmp.eq.s32.totalorder %s18, 0
      %p94 = por %p92, %p93
      %p95 = scmp.ne.s32.totalorder %s87, %s89
      %p96 = scmp.eq.s32.totalorder %s23, 31
      %p97 = por %p95, %p96
      %p98 = scmp.ne.s32.totalorder %s89, %s90
      %p99 = scmp.eq.s32.totalorder %s23, 0
      %p100 = por %p98, %p99
      %p101 = scmp.ne.s32.totalorder %s89, %s90
      %p102 = scmp.eq.s32.totalorder %s24, 31
      %p103 = por %p101, %p102
      %p105 = scmp.ne.s32.totalorder %s90, %s104
      %p106 = scmp.eq.s32.totalorder %s24, 0
      %p107 = por %p105, %p106
      %s109 = sadd.s32 %s108, 1
      %p112 = scmp.eq.s32.totalorder %s18, 31
      %p113 = scmp.ne.s32.totalorder %s108, %s110
      %p114 = scmp.eq.s32.totalorder %s18, 0
      %p115 = por %p113, %p114
      %p116 = scmp.ne.s32.totalorder %s108, %s110
      %p117 = scmp.eq.s32.totalorder %s23, 31
      %p118 = por %p116, %p117
      %p119 = scmp.ne.s32.totalorder %s110, %s111
      %p120 = scmp.eq.s32.totalorder %s23, 0
      %p121 = por %p119, %p120
      %p122 = scmp.ne.s32.totalorder %s110, %s111
      %p123 = scmp.eq.s32.totalorder %s24, 31
      %p124 = por %p122, %p123
      %p126 = scmp.ne.s32.totalorder %s111, %s125
      %p127 = scmp.eq.s32.totalorder %s24, 0
      %p128 = por %p126, %p127
      %s129 = ssub.s32 %s25, %s37
      %p130 = scmp.eq.s32.totalorder %s129, 0
      %s132 = sadd.s32 %s131, 1
      %s133 = scalar_select %p130, %s131, %s132
      %p136 = pneg %p130
      %p137 = scmp.eq.s32.totalorder %s18, 31
      %p138 = por %p136, %p137
      %p139 = scmp.ne.s32.totalorder %s131, %s134
      %p140 = scmp.eq.s32.totalorder %s18, 0
      %p141 = por %p139, %p140
      %p142 = scmp.ne.s32.totalorder %s131, %s134
      %p143 = scmp.eq.s32.totalorder %s23, 31
      %p144 = por %p142, %p143
      %p145 = scmp.ne.s32.totalorder %s134, %s135
      %p146 = scmp.eq.s32.totalorder %s23, 0
      %p147 = por %p145, %p146
      %p148 = scmp.ne.s32.totalorder %s134, %s135
      %p149 = scmp.eq.s32.totalorder %s24, 31
      %p150 = por %p148, %p149
      %p152 = scmp.ne.s32.totalorder %s135, %s151
      %p153 = scmp.eq.s32.totalorder %s24, 0
      %p154 = por %p152, %p153
      %s155 = ssub.s32 %s25, %s37
      %p156 = scmp.eq.s32.totalorder %s155, 0
      %s158 = sadd.s32 %s157, 1
      %s159 = scalar_select %p156, %s157, %s158
      %p162 = pneg %p156
      %p163 = scmp.eq.s32.totalorder %s18, 31
      %p164 = por %p162, %p163
      %p165 = scmp.ne.s32.totalorder %s157, %s160
      %p166 = scmp.eq.s32.totalorder %s18, 0
      %p167 = por %p165, %p166
      %p168 = scmp.ne.s32.totalorder %s157, %s160
      %p169 = scmp.eq.s32.totalorder %s23, 31
      %p170 = por %p168, %p169
      %p171 = scmp.ne.s32.totalorder %s160, %s161
      %p172 = scmp.eq.s32.totalorder %s23, 0
      %p173 = por %p171, %p172
      %p174 = scmp.ne.s32.totalorder %s160, %s161
      %p175 = scmp.eq.s32.totalorder %s24, 31
      %p176 = por %p174, %p175
      %p178 = scmp.ne.s32.totalorder %s161, %s177
      %p179 = scmp.eq.s32.totalorder %s24, 0
      %p180 = por %p178, %p179
      %p181 = scmp.le.s32.totalorder 1, %s18
      %p182 = scmp.lt.s32.totalorder %s18, 33
      %p183 = pnand %p181, %p182
      %p184 = pneg %p183
      // Predicated region
      $region9: #{tpu_custom_call.1} parent=5 // pred_check
        _
      $region10: #{tpu_custom_call.1} parent=5 // pred_check_branch
        %186 = sbr.rel (%p183) target = $region12
      $region11: #{tpu_custom_call.1} parent=5 // pred_region
        %s187 = ssub.s32 %s18, 1
        // Predicated region
        $region13: #{tpu_custom_call.1} parent=11 // pred_check
          %p188 = pneg %p79
        $region14: #{tpu_custom_call.1} parent=11 // pred_check_branch
          %190 = sbr.rel (%p188) target = $region16
        $region15: #{tpu_custom_call.1} parent=11 // pred_region
          _
        $region16: #{tpu_custom_call.1} parent=11 // pred_fallthru
          _
        // Predicated region
        $region17: #{tpu_custom_call.1} parent=11 // pred_check
          %p191 = pneg %p100
        $region18: #{tpu_custom_call.1} parent=11 // pred_check_branch
          %193 = sbr.rel (%p191) target = $region20
        $region19: #{tpu_custom_call.1} parent=11 // pred_region
          _
        $region20: #{tpu_custom_call.1} parent=11 // pred_fallthru
          _
        // Predicated region
        $region21: #{tpu_custom_call.1} parent=11 // pred_check
          %p194 = pneg %p121
        $region22: #{tpu_custom_call.1} parent=11 // pred_check_branch
          %196 = sbr.rel (%p194) target = $region24
        $region23: #{tpu_custom_call.1} parent=11 // pred_region
          _
        $region24: #{tpu_custom_call.1} parent=11 // pred_fallthru
          _
      $region12: #{tpu_custom_call.1} parent=5 // pred_fallthru
        _
      %p197 = scmp.lt.s32.totalorder %s18, 32
      // Predicated region
      $region25: #{tpu_custom_call.1} parent=5 // pred_check
        %p198 = pneg %p197
      $region26: #{tpu_custom_call.1} parent=5 // pred_check_branch
        %200 = sbr.rel (%p198) target = $region28
      $region27: #{tpu_custom_call.1} parent=5 // pred_region
        // Predicated region
        $region29: #{tpu_custom_call.1} parent=27 // pred_check
          %p201 = pneg %p52
        $region30: #{tpu_custom_call.1} parent=27 // pred_check_branch
          %203 = sbr.rel (%p201) target = $region32
        $region31: #{tpu_custom_call.1} parent=27 // pred_region
          %p204 = scmp.lt.s32.totalorder %s25, 1
          %s205 = scalar_select %p204, %s25, 1
          %p206 = scmp.lt.s32.totalorder %s26, 15
          %s207 = scalar_select %p206, %s26, 15
          %s208 = smul.addr %s207, 32
          %s209 = smul.addr %s205, 512
          %s210 = sadd.s32 %s208, %s209
          %s211 = smul.addr %s210, 8
          %s212 = scalar_lea.vmem %s0, %s211
        $region32: #{tpu_custom_call.1} parent=27 // pred_fallthru
          _
      $region28: #{tpu_custom_call.1} parent=5 // pred_fallthru
        _
      %p213 = scmp.le.s32.totalorder 1, %s18
      %p214 = scmp.lt.s32.totalorder %s18, 33
      %p215 = pnand %p213, %p214
      %p216 = pneg %p215
      // Predicated region
      $region33: #{tpu_custom_call.1} parent=5 // pred_check
        _
      $region34: #{tpu_custom_call.1} parent=5 // pred_check_branch
        %218 = sbr.rel (%p215) target = $region36
      $region35: #{tpu_custom_call.1} parent=5 // pred_region
        %s219 = ssub.s32 %s18, 1
        %p220 = scmp.lt.s32.totalorder %s27, 1
        %s221 = scalar_select %p220, %s27, 1
        %p222 = scmp.lt.s32.totalorder %s28, 15
        %s223 = scalar_select %p222, %s28, 15
        %s224 = smul.addr %s223, 32
        %s225 = smul.addr %s221, 512
        %s226 = sadd.s32 %s224, %s225
        %s227 = smul.addr %s226, 8
        %s228 = scalar_lea.vmem %s0, %s227
        %p229 = pneg %p58
        %p230 = pneg %p55
        %p231 = pneg %p79
        %p232 = pneg %p76
        %p233 = pneg %p100
        %p234 = pneg %p97
        %p235 = pneg %p121
        %p236 = pneg %p118
        %p237 = pneg %p147
        %p238 = pneg %p144
        %s239 = sand.u32 %s134, 1
        %s240 = scalar_lea.sflag [#allocation5], %s239
        %s241 = sand.u32 %s134, 1
        %s242 = scalar_lea.vmem [#allocation4], %s241
        %p243 = pneg %p173
        %p244 = pneg %p170
        %s245 = sand.u32 %s160, 1
        %s246 = scalar_lea.sflag [#allocation7], %s245
        %s247 = sand.u32 %s160, 1
        %s248 = scalar_lea.vmem [#allocation6], %s247
        %p249 = scmp.lt.s32.totalorder %s27, 1
        %s250 = scalar_select %p249, %s27, 1
        %p251 = scmp.lt.s32.totalorder %s28, 15
        %s252 = scalar_select %p251, %s28, 15
        %s253 = smul.addr %s252, 32
        %s254 = smul.addr %s250, 512
        %s255 = sadd.s32 %s253, %s254
        %s256 = smul.addr %s255, 8
        %s257 = scalar_lea.vmem %s0, %s256
        %p258 = scmp.eq.s32.totalorder %s28, 0
        // Predicated region
        $region37: #{tpu_custom_call.1} parent=35 // pred_check
          %p259 = pneg %p258
        $region38: #{tpu_custom_call.1} parent=35 // pred_check_branch
          %261 = sbr.rel (%p259) target = $region40
        $region39: #{tpu_custom_call.1} parent=35 // pred_region
          %vm262 = vcmask 24576
          %263 = vst.msk [vmem:[#allocation2] sm:$0x1] %vm262, 0.0
          %264 = vst.msk [vmem:[#allocation3] sm:$0x1] %vm262, 0.0
        $region40: #{tpu_custom_call.1} parent=35 // pred_fallthru
          _
        %v265 = vld [vmem:[%s257] sm:$0xff]
        %v266 = vld [vmem:[%s257 + $0x8] sm:$0xff]
        %v267 = vld [vmem:[%s257 + $0x10] sm:$0xff]
        %v268 = vld [vmem:[%s257 + $0x18] sm:$0xff]
        %v269 = vld [vmem:[%s257 + $0x20] sm:$0xff]
        %v270 = vld [vmem:[%s257 + $0x28] sm:$0xff]
        %v271 = vld [vmem:[%s257 + $0x30] sm:$0xff]
        %v272 = vld [vmem:[%s257 + $0x38] sm:$0xff]
        %v273 = vld [vmem:[%s257 + $0x40] sm:$0xff]
        %v274 = vld [vmem:[%s257 + $0x48] sm:$0xff]
        %v275 = vld [vmem:[%s257 + $0x50] sm:$0xff]
        %v276 = vld [vmem:[%s257 + $0x58] sm:$0xff]
        %v277 = vld [vmem:[%s257 + $0x60] sm:$0xff]
        %v278 = vld [vmem:[%s257 + $0x68] sm:$0xff]
        %v279 = vld [vmem:[%s257 + $0x70] sm:$0xff]
        %v280 = vld [vmem:[%s257 + $0x78] sm:$0xff]
        %v281 = vld [vmem:[%s257 + $0x80] sm:$0xff]
        %v282 = vld [vmem:[%s257 + $0x88] sm:$0xff]
        %v283 = vld [vmem:[%s257 + $0x90] sm:$0xff]
        %v284 = vld [vmem:[%s257 + $0x98] sm:$0xff]
        %v285 = vld [vmem:[%s257 + $0xa0] sm:$0xff]
        %v286 = vld [vmem:[%s257 + $0xa8] sm:$0xff]
        %v287 = vld [vmem:[%s257 + $0xb0] sm:$0xff]
        %v288 = vld [vmem:[%s257 + $0xb8] sm:$0xff]
        %v289 = vld [vmem:[%s257 + $0xc0] sm:$0xff]
        %v290 = vld [vmem:[%s257 + $0xc8] sm:$0xff]
        %v291 = vld [vmem:[%s257 + $0xd0] sm:$0xff]
        %v292 = vld [vmem:[%s257 + $0xd8] sm:$0xff]
        %v293 = vld [vmem:[%s257 + $0xe0] sm:$0xff]
        %v294 = vld [vmem:[%s257 + $0xe8] sm:$0xff]
        %v295 = vld [vmem:[%s257 + $0xf0] sm:$0xff]
        %v296 = vld [vmem:[%s257 + $0xf8] sm:$0xff]
        %v297 = vld [vmem:[#allocation2] sm:$0x1]
        %vm298 = vcmask 31744
        %v299 = vsel %vm298, %v265, 0.0
        %v300 = vsel %vm298, %v266, 0.0
        %v301 = vadd.f32 %v299, %v300
        %v302 = vsel %vm298, %v267, 0.0
        %v303 = vadd.f32 %v301, %v302
        %v304 = vsel %vm298, %v268, 0.0
        %v305 = vadd.f32 %v303, %v304
        %v306 = vsel %vm298, %v269, 0.0
        %v307 = vadd.f32 %v305, %v306
        %v308 = vsel %vm298, %v270, 0.0
        %v309 = vadd.f32 %v307, %v308
        %v310 = vsel %vm298, %v271, 0.0
        %v311 = vadd.f32 %v309, %v310
        %v312 = vsel %vm298, %v272, 0.0
        %v313 = vadd.f32 %v311, %v312
        %v314 = vsel %vm298, %v273, 0.0
        %v315 = vadd.f32 %v313, %v314
        %v316 = vsel %vm298, %v274, 0.0
        %v317 = vadd.f32 %v315, %v316
        %v318 = vsel %vm298, %v275, 0.0
        %v319 = vadd.f32 %v317, %v318
        %v320 = vsel %vm298, %v276, 0.0
        %v321 = vadd.f32 %v319, %v320
        %v322 = vsel %vm298, %v277, 0.0
        %v323 = vadd.f32 %v321, %v322
        %v324 = vsel %vm298, %v278, 0.0
        %v325 = vadd.f32 %v323, %v324
        %v326 = vsel %vm298, %v279, 0.0
        %v327 = vadd.f32 %v325, %v326
        %v328 = vsel %vm298, %v280, 0.0
        %v329 = vadd.f32 %v327, %v328
        %v330 = vsel %vm298, %v281, 0.0
        %v331 = vadd.f32 %v329, %v330
        %v332 = vsel %vm298, %v282, 0.0
        %v333 = vadd.f32 %v331, %v332
        %v334 = vsel %vm298, %v283, 0.0
        %v335 = vadd.f32 %v333, %v334
        %v336 = vsel %vm298, %v284, 0.0
        %v337 = vadd.f32 %v335, %v336
        %v338 = vsel %vm298, %v285, 0.0
        %v339 = vadd.f32 %v337, %v338
        %v340 = vsel %vm298, %v286, 0.0
        %v341 = vadd.f32 %v339, %v340
        %v342 = vsel %vm298, %v287, 0.0
        %v343 = vadd.f32 %v341, %v342
        %v344 = vsel %vm298, %v288, 0.0
        %v345 = vadd.f32 %v343, %v344
        %v346 = vsel %vm298, %v289, 0.0
        %v347 = vadd.f32 %v345, %v346
        %v348 = vsel %vm298, %v290, 0.0
        %v349 = vadd.f32 %v347, %v348
        %v350 = vsel %vm298, %v291, 0.0
        %v351 = vadd.f32 %v349, %v350
        %v352 = vsel %vm298, %v292, 0.0
        %v353 = vadd.f32 %v351, %v352
        %v354 = vsel %vm298, %v293, 0.0
        %v355 = vadd.f32 %v353, %v354
        %v356 = vsel %vm298, %v294, 0.0
        %v357 = vadd.f32 %v355, %v356
        %v358 = vsel %vm298, %v295, 0.0
        %v359 = vadd.f32 %v357, %v358
        %v360 = vsel %vm298, %v296, 0.0
        %v361 = vadd.f32 %v359, %v360
        %v362 = vrot.slane %v361, 4
        %v363 = vadd.f32 %v361, %v362
        %v364 = vrot.slane %v363, 2
        %v365 = vadd.f32 %v363, %v364
        %v366 = vrot.slane %v365, 1
        %v367 = vadd.f32 %v365, %v366
        %v368 = vadd.f32 %v297, %v367
        %vm369 = vcmask 24576
        %370 = vst.msk [vmem:[#allocation2] sm:$0x1] %vm369, %v368
        %v371 = vld [vmem:[#allocation3] sm:$0x1]
        %v372 = vmul.f32 %v265, %v265
        %v373 = vmul.f32 %v266, %v266
        %v374 = vmul.f32 %v267, %v267
        %v375 = vmul.f32 %v268, %v268
        %v376 = vmul.f32 %v269, %v269
        %v377 = vmul.f32 %v270, %v270
        %v378 = vmul.f32 %v271, %v271
        %v379 = vmul.f32 %v272, %v272
        %v380 = vmul.f32 %v273, %v273
        %v381 = vmul.f32 %v274, %v274
        %v382 = vmul.f32 %v275, %v275
        %v383 = vmul.f32 %v276, %v276
        %v384 = vmul.f32 %v277, %v277
        %v385 = vmul.f32 %v278, %v278
        %v386 = vmul.f32 %v279, %v279
        %v387 = vmul.f32 %v280, %v280
        %v388 = vmul.f32 %v281, %v281
        %v389 = vmul.f32 %v282, %v282
        %v390 = vmul.f32 %v283, %v283
        %v391 = vmul.f32 %v284, %v284
        %v392 = vmul.f32 %v285, %v285
        %v393 = vmul.f32 %v286, %v286
        %v394 = vmul.f32 %v287, %v287
        %v395 = vmul.f32 %v288, %v288
        %v396 = vmul.f32 %v289, %v289
        %v397 = vmul.f32 %v290, %v290
        %v398 = vmul.f32 %v291, %v291
        %v399 = vmul.f32 %v292, %v292
        %v400 = vmul.f32 %v293, %v293
        %v401 = vmul.f32 %v294, %v294
        %v402 = vmul.f32 %v295, %v295
        %v403 = vmul.f32 %v296, %v296
        %v404 = vsel %vm298, %v372, 0.0
        %v405 = vsel %vm298, %v373, 0.0
        %v406 = vadd.f32 %v404, %v405
        %v407 = vsel %vm298, %v374, 0.0
        %v408 = vadd.f32 %v406, %v407
        %v409 = vsel %vm298, %v375, 0.0
        %v410 = vadd.f32 %v408, %v409
        %v411 = vsel %vm298, %v376, 0.0
        %v412 = vadd.f32 %v410, %v411
        %v413 = vsel %vm298, %v377, 0.0
        %v414 = vadd.f32 %v412, %v413
        %v415 = vsel %vm298, %v378, 0.0
        %v416 = vadd.f32 %v414, %v415
        %v417 = vsel %vm298, %v379, 0.0
        %v418 = vadd.f32 %v416, %v417
        %v419 = vsel %vm298, %v380, 0.0
        %v420 = vadd.f32 %v418, %v419
        %v421 = vsel %vm298, %v381, 0.0
        %v422 = vadd.f32 %v420, %v421
        %v423 = vsel %vm298, %v382, 0.0
        %v424 = vadd.f32 %v422, %v423
        %v425 = vsel %vm298, %v383, 0.0
        %v426 = vadd.f32 %v424, %v425
        %v427 = vsel %vm298, %v384, 0.0
        %v428 = vadd.f32 %v426, %v427
        %v429 = vsel %vm298, %v385, 0.0
        %v430 = vadd.f32 %v428, %v429
        %v431 = vsel %vm298, %v386, 0.0
        %v432 = vadd.f32 %v430, %v431
        %v433 = vsel %vm298, %v387, 0.0
        %v434 = vadd.f32 %v432, %v433
        %v435 = vsel %vm298, %v388, 0.0
        %v436 = vadd.f32 %v434, %v435
        %v437 = vsel %vm298, %v389, 0.0
        %v438 = vadd.f32 %v436, %v437
        %v439 = vsel %vm298, %v390, 0.0
        %v440 = vadd.f32 %v438, %v439
        %v441 = vsel %vm298, %v391, 0.0
        %v442 = vadd.f32 %v440, %v441
        %v443 = vsel %vm298, %v392, 0.0
        %v444 = vadd.f32 %v442, %v443
        %v445 = vsel %vm298, %v393, 0.0
        %v446 = vadd.f32 %v444, %v445
        %v447 = vsel %vm298, %v394, 0.0
        %v448 = vadd.f32 %v446, %v447
        %v449 = vsel %vm298, %v395, 0.0
        %v450 = vadd.f32 %v448, %v449
        %v451 = vsel %vm298, %v396, 0.0
        %v452 = vadd.f32 %v450, %v451
        %v453 = vsel %vm298, %v397, 0.0
        %v454 = vadd.f32 %v452, %v453
        %v455 = vsel %vm298, %v398, 0.0
        %v456 = vadd.f32 %v454, %v455
        %v457 = vsel %vm298, %v399, 0.0
        %v458 = vadd.f32 %v456, %v457
        %v459 = vsel %vm298, %v400, 0.0
        %v460 = vadd.f32 %v458, %v459
        %v461 = vsel %vm298, %v401, 0.0
        %v462 = vadd.f32 %v460, %v461
        %v463 = vsel %vm298, %v402, 0.0
        %v464 = vadd.f32 %v462, %v463
        %v465 = vsel %vm298, %v403, 0.0
        %v466 = vadd.f32 %v464, %v465
        %v467 = vrot.slane %v466, 4
        %v468 = vadd.f32 %v466, %v467
        %v469 = vrot.slane %v468, 2
        %v470 = vadd.f32 %v468, %v469
        %v471 = vrot.slane %v470, 1
        %v472 = vadd.f32 %v470, %v471
        %v473 = vadd.f32 %v371, %v472
        %474 = vst.msk [vmem:[#allocation3] sm:$0x1] %vm369, %v473
        %p475 = scmp.eq.s32.totalorder %s28, 15
        // Predicated region
        $region41: #{tpu_custom_call.1} parent=35 // pred_check
          %p476 = pneg %p475
        $region42: #{tpu_custom_call.1} parent=35 // pred_check_branch
          %478 = sbr.rel (%p476) target = $region44
        $region43: #{tpu_custom_call.1} parent=35 // pred_region
          %v479 = vld [vmem:[#allocation2] sm:$0x1]
          %v480 = vld [vmem:[%s3] sm:$0xf]
          %v482 = vsel %vm298, %v479, 0
          %vm484 = vcmask 1043456
          %v486 = vsel %vm484, %v480, 0
          %488 = vmatprep.subr.mxu0 0.0
          %489 = vmatpush1.msra.mxu0 %v486
          %490 = vmatprep.subr.mxu0 0.0
          %491 = vmatpush1.msra.mxu0 0.0
          %492 = vmatprep.subr.mxu0 0.0
          %493 = vmatpush1.msra.mxu0 0.0
          %494 = vmatprep.subr.mxu0 0.0
          %495 = vmatpush1.msra.mxu0 0.0
          %496 = vmatprep.subr.mxu0 0.0
          %497 = vmatpush1.msra.mxu0 0.0
          %498 = vmatprep.subr.mxu0 0.0
          %499 = vmatpush1.msra.mxu0 0.0
          %500 = vmatprep.subr.mxu0 0.0
          %501 = vmatpush1.msra.mxu0 0.0
          %502 = vmatprep.subr.mxu0 0.0
          %503 = vmatpush1.msra.mxu0 0.0
          %504 = vmatprep.subr.mxu0 0.0
          %505 = vmatpush1.msra.mxu0 0.0
          %506 = vmatprep.subr.mxu0 0.0
          %507 = vmatpush1.msra.mxu0 0.0
          %508 = vmatprep.subr.mxu0 0.0
          %509 = vmatpush1.msra.mxu0 0.0
          %510 = vmatprep.subr.mxu0 0.0
          %511 = vmatpush1.msra.mxu0 0.0
          %512 = vmatprep.subr.mxu0 0.0
          %513 = vmatpush1.msra.mxu0 0.0
          %514 = vmatprep.subr.mxu0 0.0
          %515 = vmatpush1.msra.mxu0 0.0
          %516 = vmatprep.subr.mxu0 0.0
          %517 = vmatpush1.msra.mxu0 0.0
          %518 = vmatprep.subr.mxu0 0.0
          %519 = vmatpush1.msra.mxu0 0.0
          %520 = vmatprep.subr.mxu0 0.0
          %521 = vmatpush1.msra.mxu0 0.0
          %522 = vmatprep.subr.mxu0 0.0
          %523 = vmatpush1.msra.mxu0 0.0
          %524 = vmatprep.subr.mxu0 0.0
          %525 = vmatpush1.msra.mxu0 0.0
          %526 = vmatprep.subr.mxu0 0.0
          %527 = vmatpush1.msra.mxu0 0.0
          %528 = vmatprep.subr.mxu0 0.0
          %529 = vmatpush1.msra.mxu0 0.0
          %530 = vmatprep.subr.mxu0 0.0
          %531 = vmatpush1.msra.mxu0 0.0
          %532 = vmatprep.subr.mxu0 0.0
          %533 = vmatpush1.msra.mxu0 0.0
          %534 = vmatprep.subr.mxu0 0.0
          %535 = vmatpush1.msra.mxu0 0.0
          %536 = vmatprep.subr.mxu0 0.0
          %537 = vmatpush1.msra.mxu0 0.0
          %538 = vmatprep.subr.mxu0 0.0
          %539 = vmatpush1.msra.mxu0 0.0
          %540 = vmatprep.subr.mxu0 0.0
          %541 = vmatpush1.msra.mxu0 0.0
          %542 = vmatprep.subr.mxu0 0.0
          %543 = vmatpush1.msra.mxu0 0.0
          %544 = vmatprep.subr.mxu0 0.0
          %545 = vmatpush1.msra.mxu0 0.0
          %546 = vmatprep.subr.mxu0 0.0
          %547 = vmatpush1.msra.mxu0 0.0
          %548 = vmatprep.subr.mxu0 0.0
          %549 = vmatpush1.msra.mxu0 0.0
          %550 = vmatprep.subr.mxu0 0.0
          %551 = vmatpush1.msra.mxu0 0.0
          %552 = vmatprep.mubr.f32.mxu0 0.0
          %553 = vmatmul.mubr.f32.gmra.mrb[0].mxu0 %v482
          %v554 = vpop.f32.mrb[0].mxu0
          %v555 = vadd.f32 0.0, %v554
          %v556 = vpop.f32.mrb[0].mxu0
          %557 = vdwg.mxu0
          %v558 = vmul.f32 %v555, 0.00012207031
          %v559 = vld [vmem:[#allocation3] sm:$0x1]
          %v561 = vsel %vm298, %v559, 0
          %563 = vmatprep.subr.mxu0 0.0
          %564 = vmatpush1.msra.mxu0 %v486
          %565 = vmatprep.subr.mxu0 0.0
          %566 = vmatpush1.msra.mxu0 0.0
          %567 = vmatprep.subr.mxu0 0.0
          %568 = vmatpush1.msra.mxu0 0.0
          %569 = vmatprep.subr.mxu0 0.0
          %570 = vmatpush1.msra.mxu0 0.0
          %571 = vmatprep.subr.mxu0 0.0
          %572 = vmatpush1.msra.mxu0 0.0
          %573 = vmatprep.subr.mxu0 0.0
          %574 = vmatpush1.msra.mxu0 0.0
          %575 = vmatprep.subr.mxu0 0.0
          %576 = vmatpush1.msra.mxu0 0.0
          %577 = vmatprep.subr.mxu0 0.0
          %578 = vmatpush1.msra.mxu0 0.0
          %579 = vmatprep.subr.mxu0 0.0
          %580 = vmatpush1.msra.mxu0 0.0
          %581 = vmatprep.subr.mxu0 0.0
          %582 = vmatpush1.msra.mxu0 0.0
          %583 = vmatprep.subr.mxu0 0.0
          %584 = vmatpush1.msra.mxu0 0.0
          %585 = vmatprep.subr.mxu0 0.0
          %586 = vmatpush1.msra.mxu0 0.0
          %587 = vmatprep.subr.mxu0 0.0
          %588 = vmatpush1.msra.mxu0 0.0
          %589 = vmatprep.subr.mxu0 0.0
          %590 = vmatpush1.msra.mxu0 0.0
          %591 = vmatprep.subr.mxu0 0.0
          %592 = vmatpush1.msra.mxu0 0.0
          %593 = vmatprep.subr.mxu0 0.0
          %594 = vmatpush1.msra.mxu0 0.0
          %595 = vmatprep.subr.mxu0 0.0
          %596 = vmatpush1.msra.mxu0 0.0
          %597 = vmatprep.subr.mxu0 0.0
          %598 = vmatpush1.msra.mxu0 0.0
          %599 = vmatprep.subr.mxu0 0.0
          %600 = vmatpush1.msra.mxu0 0.0
          %601 = vmatprep.subr.mxu0 0.0
          %602 = vmatpush1.msra.mxu0 0.0
          %603 = vmatprep.subr.mxu0 0.0
          %604 = vmatpush1.msra.mxu0 0.0
          %605 = vmatprep.subr.mxu0 0.0
          %606 = vmatpush1.msra.mxu0 0.0
          %607 = vmatprep.subr.mxu0 0.0
          %608 = vmatpush1.msra.mxu0 0.0
          %609 = vmatprep.subr.mxu0 0.0
          %610 = vmatpush1.msra.mxu0 0.0
          %611 = vmatprep.subr.mxu0 0.0
          %612 = vmatpush1.msra.mxu0 0.0
          %613 = vmatprep.subr.mxu0 0.0
          %614 = vmatpush1.msra.mxu0 0.0
          %615 = vmatprep.subr.mxu0 0.0
          %616 = vmatpush1.msra.mxu0 0.0
          %617 = vmatprep.subr.mxu0 0.0
          %618 = vmatpush1.msra.mxu0 0.0
          %619 = vmatprep.subr.mxu0 0.0
          %620 = vmatpush1.msra.mxu0 0.0
          %621 = vmatprep.subr.mxu0 0.0
          %622 = vmatpush1.msra.mxu0 0.0
          %623 = vmatprep.subr.mxu0 0.0
          %624 = vmatpush1.msra.mxu0 0.0
          %625 = vmatprep.subr.mxu0 0.0
          %626 = vmatpush1.msra.mxu0 0.0
          %627 = vmatprep.mubr.f32.mxu0 0.0
          %628 = vmatmul.mubr.f32.gmra.mrb[0].mxu0 %v561
          %v629 = vpop.f32.mrb[0].mxu0
          %v630 = vadd.f32 0.0, %v629
          %v631 = vpop.f32.mrb[0].mxu0
          %632 = vdwg.mxu0
          %v633 = vmul.f32 %v630, 0.00012207031
          %v634 = vmul.f32 %v558, %v558
          %v635 = vsub.f32 %v633, %v634
          %v636 = vmax.f32 %v635, 0.0
          %v637 = vld [vmem:[%s1] sm:$0x1]
          %v638 = vadd.f32 %v636, 1e-06
          %v639 = vrsqrt.pop %v638
          %v640 = vmul.f32 %v637, %v639
          %641 = vst.msk [vmem:[%s242] sm:$0x1] %vm369, %v640
          %v642 = vld [vmem:[%s2] sm:$0x1]
          %v643 = vmul.f32 %v558, %v640
          %v644 = vsub.f32 %v642, %v643
          %645 = vst.msk [vmem:[%s248] sm:$0x1] %vm369, %v644
        $region44: #{tpu_custom_call.1} parent=35 // pred_fallthru
          _
        %s646 = sand.u32 %s134, 1
        %s647 = scalar_lea.sflag [#allocation5], %s646
        %s648 = sand.u32 %s134, 1
        %s649 = scalar_lea.vmem [#allocation4], %s648
        %s650 = sand.u32 %s160, 1
        %s651 = scalar_lea.sflag [#allocation7], %s650
        %s652 = sand.u32 %s160, 1
        %s653 = scalar_lea.vmem [#allocation6], %s652
        // Predicated region
        $region45: #{tpu_custom_call.1} parent=35 // pred_check
          %p654 = pneg %p144
        $region46: #{tpu_custom_call.1} parent=35 // pred_check_branch
          %656 = sbr.rel (%p654) target = $region48
        $region47: #{tpu_custom_call.1} parent=35 // pred_region
          %s658 = ssub.s32 16, 16
          %659 = vsyncadd %s647, %s658
          %s660 = smul.addr %s27, 16
          %s661 = scalar_lea.hbm %s4, %s660
          %s663 = sshll.u32 %s649, 4
          %s664 = int_to_ptr.vmem [resolvable:$true] %s663
          %666 = dma.vmem_to_hbm [thread:$0]  %s664, 16, %s661, %s647
        $region48: #{tpu_custom_call.1} parent=35 // pred_fallthru
          _
        // Predicated region
        $region49: #{tpu_custom_call.1} parent=35 // pred_check
          %p667 = pneg %p170
        $region50: #{tpu_custom_call.1} parent=35 // pred_check_branch
          %669 = sbr.rel (%p667) target = $region52
        $region51: #{tpu_custom_call.1} parent=35 // pred_region
          %s671 = ssub.s32 16, 16
          %672 = vsyncadd %s651, %s671
          %s673 = smul.addr %s27, 16
          %s674 = scalar_lea.hbm %s5, %s673
          %s676 = sshll.u32 %s653, 4
          %s677 = int_to_ptr.vmem [resolvable:$true] %s676
          %679 = dma.vmem_to_hbm [thread:$0]  %s677, 16, %s674, %s651
        $region52: #{tpu_custom_call.1} parent=35 // pred_fallthru
          _
      $region36: #{tpu_custom_call.1} parent=5 // pred_fallthru
        _
      %p680 = scmp.le.s32.totalorder 2, %s18
      // Predicated region
      $region53: #{tpu_custom_call.1} parent=5 // pred_check
        %p681 = pneg %p680
      $region54: #{tpu_custom_call.1} parent=5 // pred_check_branch
        %683 = sbr.rel (%p681) target = $region56
      $region55: #{tpu_custom_call.1} parent=5 // pred_region
        %s684 = ssub.s32 %s18, 2
        // Predicated region
        $region57: #{tpu_custom_call.1} parent=55 // pred_check
          %p685 = pneg %p150
        $region58: #{tpu_custom_call.1} parent=55 // pred_check_branch
          %687 = sbr.rel (%p685) target = $region60
        $region59: #{tpu_custom_call.1} parent=55 // pred_region
          %s688 = sand.u32 %s135, 1
          %s689 = scalar_lea.sflag [#allocation5], %s688
          %s690 = sand.u32 %s135, 1
          %s691 = scalar_lea.vmem [#allocation4], %s690
          %692 = dma.done %s689, 16
        $region60: #{tpu_custom_call.1} parent=55 // pred_fallthru
          _
        // Predicated region
        $region61: #{tpu_custom_call.1} parent=55 // pred_check
          %p693 = pneg %p176
        $region62: #{tpu_custom_call.1} parent=55 // pred_check_branch
          %695 = sbr.rel (%p693) target = $region64
        $region63: #{tpu_custom_call.1} parent=55 // pred_region
          %s696 = sand.u32 %s161, 1
          %s697 = scalar_lea.sflag [#allocation7], %s696
          %s698 = sand.u32 %s161, 1
          %s699 = scalar_lea.vmem [#allocation6], %s698
          %700 = dma.done %s697, 16
        $region64: #{tpu_custom_call.1} parent=55 // pred_fallthru
          _
      $region56: #{tpu_custom_call.1} parent=5 // pred_fallthru
        _
    $region6: #{tpu_custom_call.1} parent=1 // loop_footer
      %s22 = sadd.s32 1, %s18
    $region7: #{tpu_custom_call.1} parent=1 // loop_footer_branch
      %17 = sbr.rel target = $region3
    $region8: #{tpu_custom_call.1} parent=1 // loop_exit
      _
    %701 = vsyncpa [#allocation5], 1
    %s702 = scalar_lea.sflag [#allocation5], 1
    %703 = vsyncpa %s702, 1
    %704 = vsyncpa [#allocation7], 1
    %s705 = scalar_lea.sflag [#allocation7], 1
    %706 = vsyncpa %s705, 1

</llo_original>
